<compile_context>
chip_gen: v7x
topology: tpu7x:2x2x1
jax: 0.10.0
libtpu: 0.0.40
codegen_flags: <defaults>
</compile_context>

<pallas_src>
import math
import functools

import jax
import jax.numpy as jnp
from jax import lax
from jax.experimental import pallas as pl
from jax.experimental.pallas import tpu as pltpu


# ----------------------------------------------------------------------------
# Generation-aware VMEM budget / tile targets.
# ----------------------------------------------------------------------------
def _vmem_capacity_bytes():
    try:
        return int(pltpu.get_tpu_info().vmem_capacity_bytes)
    except Exception:
        return 64 * 1024 * 1024          # conservative fallback (v7x physical VMEM)


_VMEM_CAP = _vmem_capacity_bytes()
# ~45% of physical VMEM: v5e/v6e (128 MiB) -> ~57 MiB, v7x (64 MiB) -> ~28 MiB.
_VMEM_LIMIT = min(int(_VMEM_CAP * 0.45), 96 * 1024 * 1024)

# Projection tile targets: bigger blocks on 128 MiB parts, smaller on v7x.
if _VMEM_CAP >= 96 * 1024 * 1024:
    _PROJ_TM, _PROJ_TN, _PROJ_TK = 512, 512, 1024
else:
    _PROJ_TM, _PROJ_TN, _PROJ_TK = 256, 256, 512


def _round_up(x, m):
    return -(-x // m) * m


def _pick_tile(dim, target, min_tile):
    """Largest power-of-two-ish tile <= target that divides `dim` and is a multiple
    of `min_tile`; falls back to the full dim (always a legal block)."""
    if dim <= target:
        return dim
    t = target
    while t >= min_tile:
        if dim % t == 0:
            return t
        t //= 2
    return dim


# ----------------------------------------------------------------------------
# Tiled matmul + bias kernel:  out = x @ W + b
#   grid = (M//tm, N//tn, K//tk); f32 accumulator in VMEM; K axis is the
#   reduction ("arbitrary", innermost).  x and W arrive already in the compute
#   dtype (cast in the wrapper) so the steady state is a single MXU dot.
# ----------------------------------------------------------------------------
def _matmul_bias_kernel(x_ref, w_ref, b_ref, o_ref, acc_ref):
    @pl.when(pl.program_id(2) == 0)
    def _init():
        acc_ref[...] = jnp.zeros(acc_ref.shape, jnp.float32)

    acc_ref[...] += jnp.dot(x_ref[...], w_ref[...],
                            preferred_element_type=jnp.float32)

    @pl.when(pl.program_id(2) == pl.num_programs(2) - 1)
    def _finalize():
        o_ref[...] = (acc_ref[...] + b_ref[...].astype(jnp.float32)).astype(o_ref.dtype)


def linear(x, w, b, *, out_dtype=jnp.float32, tm=None, tn=None, tk=None):
    """x: (M, K) in compute dtype, w: (K, N) pre-transposed (in, out), b: (1, N)."""
    M, K = x.shape
    _, N = w.shape
    tm = _pick_tile(M, tm or _PROJ_TM, 8)
    tn = _pick_tile(N, tn or _PROJ_TN, 128)
    tk = _pick_tile(K, tk or _PROJ_TK, 128)
    grid = (M // tm, N // tn, K // tk)
    return pl.pallas_call(
        _matmul_bias_kernel,
        out_shape=jax.ShapeDtypeStruct((M, N), out_dtype),
        grid=grid,
        in_specs=[
            pl.BlockSpec((tm, tk), lambda i, j, k: (i, k)),
            pl.BlockSpec((tk, tn), lambda i, j, k: (k, j)),
            pl.BlockSpec((1, tn), lambda i, j, k: (0, j)),
        ],
        out_specs=pl.BlockSpec((tm, tn), lambda i, j, k: (i, j)),
        scratch_shapes=[pltpu.VMEM((tm, tn), jnp.float32)],
        compiler_params=pltpu.CompilerParams(
            dimension_semantics=("parallel", "parallel", "arbitrary"),
            vmem_limit_bytes=_VMEM_LIMIT),
        cost_estimate=pl.CostEstimate(
            flops=int(2 * M * N * K),
            transcendentals=0,
            bytes_accessed=int(M * K * x.dtype.itemsize
                               + K * N * w.dtype.itemsize
                               + M * N * jnp.dtype(out_dtype).itemsize)),
    )(x, w, b)


# ----------------------------------------------------------------------------
# Flash-style multi-head attention.
#   Inputs are head-major: Q (B, H, Sq, Dh), K/V (B, H, Skv, Dh).
#   grid = (B, Sq//tq, Skv//tkv); online softmax stats per head in VMEM scratch;
#   output written as a lane-dense (tq, E) slab per (b, qi) tile.
# ----------------------------------------------------------------------------
def _flash_attn_kernel(q_ref, k_ref, v_ref, o_ref, m_ref, l_ref, acc_ref,
                       *, nhead, head_dim, approx):
    ki = pl.program_id(2)

    @pl.when(ki == 0)
    def _init():
        m_ref[...] = jnp.full(m_ref.shape, -jnp.inf, jnp.float32)
        l_ref[...] = jnp.zeros(l_ref.shape, jnp.float32)
        acc_ref[...] = jnp.zeros(acc_ref.shape, jnp.float32)

    # Per-head slices straight from the refs (leading-axis slices of (tile, Dh)
    # blocks -> no relayout, bounded live ranges).  1/sqrt(Dh) is already folded
    # into the Q projection, so no per-step scale multiply here.
    for h in range(nhead):
        q = q_ref[0, h]                                   # (tq,  Dh)
        k = k_ref[0, h]                                   # (tkv, Dh)
        v = v_ref[0, h]                                   # (tkv, Dh)
        # (tq, tkv) scores: contract on Dh directly -> no explicit K transpose.
        s = lax.dot_general(q, k, dimension_numbers=(((1,), (1,)), ((), ())),
                            preferred_element_type=jnp.float32)
        m_prev = m_ref[h]                                 # (tq, 1)
        m_new = jnp.maximum(m_prev, jnp.max(s, axis=-1, keepdims=True))
        alpha = jnp.exp(m_prev - m_new)
        p = jnp.exp(s - m_new)                            # (tq, tkv)
        l_ref[h] = alpha * l_ref[h] + jnp.sum(p, axis=-1, keepdims=True)
        m_ref[h] = m_new
        acc_ref[h] = alpha * acc_ref[h] + jnp.dot(
            p.astype(v.dtype), v, preferred_element_type=jnp.float32)

    @pl.when(ki == pl.num_programs(2) - 1)
    def _finalize():
        # Normalize after the PV matmul; store each head's slab directly into the
        # lane-dense (tq, E) output block (no concat, no extra full-slab value).
        for h in range(nhead):
            out_h = acc_ref[h] * pl.reciprocal(l_ref[h], approx=approx)
            o_ref[0, :, h * head_dim:(h + 1) * head_dim] = out_h.astype(o_ref.dtype)


def _flash_tiles(B, Sq, Skv, H, Dh, E, in_itemsize, out_itemsize):
    budget = int(_VMEM_LIMIT * 0.8)
    dh_pad = _round_up(Dh, 128)      # lane padding of (tile, Dh) blocks
    e_pad = _round_up(E, 128)

    def footprint(tq, tkv):
        inputs = 2 * H * (tq + 2 * tkv) * dh_pad * in_itemsize   # double-buffered Q/K/V
        out = 2 * tq * e_pad * out_itemsize                      # double-buffered output
        scratch = H * tq * (2 * 128 + dh_pad) * 4                # m, l (lane-padded), acc
        return inputs + out + scratch

    tq = _pick_tile(Sq, 512, 8)
    tkv = _pick_tile(Skv, 512, 8)
    while footprint(tq, tkv) > budget and max(tq, tkv) > 128:
        new_tq, new_tkv = tq, tkv
        if tkv >= tq and tkv > 128:
            new_tkv = _pick_tile(Skv, tkv // 2, 8)
        elif tq > 128:
            new_tq = _pick_tile(Sq, tq // 2, 8)
        if (new_tq, new_tkv) == (tq, tkv):
            break
        tq, tkv = new_tq, new_tkv

    # v7x megacore: keep the parallel grid extent (B * Sq//tq) >= 2 so neither
    # TensorCore idles; split the Q tile if the grid would degenerate.
    while B * (Sq // tq) < 2 and tq >= 16 and Sq % (tq // 2) == 0:
        tq //= 2
    return tq, tkv


def flash_mha(qh, kh, vh, *, out_dtype=None):
    """qh: (B, H, Sq, Dh), kh/vh: (B, H, Skv, Dh) -> (B, Sq, H*Dh)."""
    B, H, Sq, Dh = qh.shape
    Skv = kh.shape[2]
    E = H * Dh
    out_dtype = qh.dtype if out_dtype is None else out_dtype
    in_item = qh.dtype.itemsize
    out_item = jnp.dtype(out_dtype).itemsize
    tq, tkv = _flash_tiles(B, Sq, Skv, H, Dh, E, in_item, out_item)
    approx = jnp.dtype(qh.dtype) != jnp.dtype(jnp.float32)   # fast recip off f32 path
    kern = functools.partial(_flash_attn_kernel, nhead=H, head_dim=Dh, approx=approx)
    # TODO(synk): on v5e with small Dh, pipeline_mode=pl.Buffered(3) on the K/V
    #             specs would further hide the KV-stream DMA.
    return pl.pallas_call(
        kern,
        out_shape=jax.ShapeDtypeStruct((B, Sq, E), out_dtype),
        grid=(B, Sq // tq, Skv // tkv),
        in_specs=[
            pl.BlockSpec((1, H, tq, Dh), lambda b, qi, ki: (b, 0, qi, 0)),   # Q
            pl.BlockSpec((1, H, tkv, Dh), lambda b, qi, ki: (b, 0, ki, 0)),  # K
            pl.BlockSpec((1, H, tkv, Dh), lambda b, qi, ki: (b, 0, ki, 0)),  # V
        ],
        out_specs=pl.BlockSpec((1, tq, E), lambda b, qi, ki: (b, qi, 0)),
        scratch_shapes=[
            pltpu.VMEM((H, tq, 1), jnp.float32),     # running max m
            pltpu.VMEM((H, tq, 1), jnp.float32),     # running denom l
            pltpu.VMEM((H, tq, Dh), jnp.float32),    # output accumulator
        ],
        compiler_params=pltpu.CompilerParams(
            dimension_semantics=("parallel", "parallel", "arbitrary"),
            vmem_limit_bytes=_VMEM_LIMIT),
        cost_estimate=pl.CostEstimate(
            flops=int(4 * B * H * Sq * Skv * Dh),
            transcendentals=int(B * H * Sq * Skv),
            bytes_accessed=int(B * H * Sq * Dh * in_item
                               + 2 * B * H * Skv * Dh * in_item * (Sq // tq)
                               + B * Sq * E * out_item)),
    )(qh, kh, vh)


# ----------------------------------------------------------------------------
# Parameter prep (once) + full module forward.
# ----------------------------------------------------------------------------
def prepare_params(raw, nhead, compute_dtype=jnp.bfloat16):
    """One-time prep: fold 1/sqrt(Dh) into the Q projection, build the fused
    (E, 3E) QKV weight/bias, cast weights to the MXU compute dtype (biases f32)."""
    E = raw["q_w"].shape[0]
    scale = 1.0 / math.sqrt(E // nhead)
    qw, qb = raw["q_w"] * scale, raw["q_b"] * scale
    f32 = jnp.float32
    return {
        "qkv_w": jnp.concatenate([qw, raw["k_w"], raw["v_w"]], axis=1).astype(compute_dtype),
        "qkv_b": jnp.concatenate([qb, raw["k_b"], raw["v_b"]], axis=1).astype(f32),
        "q_w": qw.astype(compute_dtype), "q_b": qb.astype(f32),
        "k_w": raw["k_w"].astype(compute_dtype), "k_b": raw["k_b"].astype(f32),
        "v_w": raw["v_w"].astype(compute_dtype), "v_b": raw["v_b"].astype(f32),
        "o_w": raw["o_w"].astype(compute_dtype), "o_b": raw["o_b"].astype(f32),
    }


def multihead_attention(q, k, v, params, nhead, *, compute_dtype=jnp.bfloat16):
    """Forward matching torch MultiheadAttention (eval, dropout=0, no attn_mask).
    `params` must come from prepare_params(..., compute_dtype=compute_dtype)."""
    B, Sq, E = q.shape
    Dh = E // nhead
    cast = lambda a: a.astype(compute_dtype)

    if (q is k) and (k is v):
        # Self-attention: one fused (M, E) @ (E, 3E) projection, x read once.
        qkv = linear(cast(q.reshape(B * Sq, E)), params["qkv_w"], params["qkv_b"],
                     out_dtype=compute_dtype)                                # (M, 3E)
        # Single transpose to head-major so the flash kernel sees lane-dense
        # (tile, Dh) blocks per head (no in-kernel sub-lane head slicing).
        qkv = qkv.reshape(B, Sq, 3, nhead, Dh).transpose(2, 0, 3, 1, 4)      # (3,B,H,S,Dh)
        Qh, Kh, Vh = qkv[0], qkv[1], qkv[2]
    else:
        def proj(x, wname, bname):
            b_, s_, _ = x.shape
            y = linear(cast(x.reshape(b_ * s_, E)), params[wname], params[bname],
                       out_dtype=compute_dtype)
            return y.reshape(b_, s_, nhead, Dh).transpose(0, 2, 1, 3)        # (B,H,S,Dh)
        Qh = proj(q, "q_w", "q_b")
        Kh = proj(k, "k_w", "k_b")
        Vh = proj(v, "v_w", "v_b")

    y = flash_mha(Qh, Kh, Vh)                                                # (B, Sq, E)
    out = linear(y.reshape(B * Sq, E), params["o_w"], params["o_b"],
                 out_dtype=jnp.float32)
    return out.reshape(B, Sq, E)


# ----------------------------------------------------------------------------
# Pure-JAX reference (raw f32 parameters).
# ----------------------------------------------------------------------------
def reference(q, k, v, params, nhead):
    B, S, E = q.shape
    Dh = E // nhead

    def proj(x, name):
        return x @ params[name + "_w"] + params[name + "_b"][0]

    def split(t):
        b_, s_, _ = t.shape
        return t.reshape(b_, s_, nhead, Dh).transpose(0, 2, 1, 3)

    Q, K, V = split(proj(q, "q")), split(proj(k, "k")), split(proj(v, "v"))
    att = jnp.einsum("bhqd,bhkd->bhqk", Q, K) / math.sqrt(Dh)
    att = jax.nn.softmax(att, axis=-1)
    y = jnp.einsum("bhqk,bhkd->bhqd", att, V)
    y = y.transpose(0, 2, 1, 3).reshape(B, S, E)
    return y @ params["o_w"] + params["o_b"][0]


if __name__ == "__main__":
    B, S, E, H = 2, 8, 32, 4
    key = jax.random.PRNGKey(0)
    ks = jax.random.split(key, 11)

    # Deterministic parameter init (weights stored pre-transposed: (in, out)).
    raw = {}
    for i, name in enumerate(["q", "k", "v", "o"]):
        raw[name + "_w"] = 0.02 * jax.random.normal(ks[2 * i], (E, E), jnp.float32)
        raw[name + "_b"] = 0.01 * jax.random.normal(ks[2 * i + 1], (1, E), jnp.float32)

    x = jax.random.normal(ks[8], (B, S, E), jnp.float32)
    k_in = jax.random.normal(ks[9], (B, S, E), jnp.float32)
    v_in = jax.random.normal(ks[10], (B, S, E), jnp.float32)

    ref_self = reference(x, x, x, raw, H)
    ref_cross = reference(x, k_in, v_in, raw, H)

    # 1) f32 path (tight tolerance): self-attention, fused QKV projection.
    p32 = prepare_params(raw, H, compute_dtype=jnp.float32)
    out_self = jax.block_until_ready(
        multihead_attention(x, x, x, p32, H, compute_dtype=jnp.float32))
    assert out_self.shape == (B, S, E)
    assert jnp.allclose(out_self, ref_self, atol=1e-4, rtol=1e-4), "self-attn f32 mismatch"

    # 2) f32 cross-attention path (separate Q/K/V projections, no stack).
    out_cross = jax.block_until_ready(
        multihead_attention(x, k_in, v_in, p32, H, compute_dtype=jnp.float32))
    assert jnp.allclose(out_cross, ref_cross, atol=1e-4, rtol=1e-4), "cross-attn f32 mismatch"

    # 3) default bf16 MXU-input path (f32 accumulation) — looser tolerance.
    pbf16 = prepare_params(raw, H)                       # compute_dtype=bfloat16 default
    out_bf16 = jax.block_until_ready(multihead_attention(x, x, x, pbf16, H))
    assert jnp.allclose(out_bf16, ref_self, atol=5e-2, rtol=5e-2), "bf16 mismatch"

    print("KERNEL_OK")
</pallas_src>

<mosaic_0001>
module attributes {stable_mosaic.version = 11 : i64} {
  func.func @_matmul_bias_kernel(%arg0: i32, %arg1: i32, %arg2: i32, %arg3: memref<16x32xf32, #tpu.memory_space<vmem>>, %arg4: memref<32x96xf32, #tpu.memory_space<vmem>>, %arg5: memref<1x96xf32, #tpu.memory_space<vmem>>, %arg6: memref<16x96xf32, #tpu.memory_space<vmem>>, %arg7: memref<16x96xf32, #tpu.memory_space<vmem>>) attributes {dimension_semantics = [#tpu.dimension_semantics<parallel>, #tpu.dimension_semantics<parallel>, #tpu.dimension_semantics<arbitrary>], iteration_bounds = array<i64: 1, 1, 1>, scalar_prefetch = 0 : i64, scratch_operands = 1 : i64, tpu.core_type = #tpu.core_type<tc>, window_params = [{transform_indices = @transform_0, window_bounds = array<i64: 16, 32>}, {transform_indices = @transform_1, window_bounds = array<i64: 32, 96>}, {transform_indices = @transform_2, window_bounds = array<i64: 1, 96>}, {transform_indices = @transform_3, window_bounds = array<i64: 16, 96>}]} {
    %c0_i32 = arith.constant 0 : i32
    %0 = arith.cmpi eq, %arg2, %c0_i32 : i32
    %1 = arith.extui %0 : i1 to i32
    %c0_i32_0 = arith.constant 0 : i32
    %2 = arith.cmpi ne, %1, %c0_i32_0 : i32
    scf.if %2 {
      %cst_10 = arith.constant 0.000000e+00 : f32
      %12 = vector.broadcast %cst_10 : f32 to vector<16x96xf32>
      %c0_11 = arith.constant 0 : index
      %c0_12 = arith.constant 0 : index
      %13 = vector.load %arg7[%c0_11, %c0_12] : memref<16x96xf32, #tpu.memory_space<vmem>>, vector<16x96xf32>
      tpu.vector_store %arg7[%c0_11, %c0_12], %12 {strides = array<i32>} : memref<16x96xf32, #tpu.memory_space<vmem>>, vector<16x96xf32>,
    } else {
    }
    %c0 = arith.constant 0 : index
    %c0_1 = arith.constant 0 : index
    %3 = vector.load %arg7[%c0, %c0_1] : memref<16x96xf32, #tpu.memory_space<vmem>>, vector<16x96xf32>
    %c0_2 = arith.constant 0 : index
    %c0_3 = arith.constant 0 : index
    %4 = vector.load %arg3[%c0_2, %c0_3] : memref<16x32xf32, #tpu.memory_space<vmem>>, vector<16x32xf32>
    %c0_4 = arith.constant 0 : index
    %c0_5 = arith.constant 0 : index
    %5 = vector.load %arg4[%c0_4, %c0_5] : memref<32x96xf32, #tpu.memory_space<vmem>>, vector<32x96xf32>
    %cst = arith.constant dense<0.000000e+00> : vector<16x96xf32>
    %6 = tpu.matmul %4, %5, %cst {dimension_numbers = #tpu.dot_dimension_numbers<[1], [0], [0], [1], [0, 0, 1, 1], [], []>} : vector<16x32xf32>, vector<32x96xf32>, vector<16x96xf32> -> vector<16x96xf32>
    %7 = arith.addf %3, %6 : vector<16x96xf32>
    %c0_6 = arith.constant 0 : index
    %c0_7 = arith.constant 0 : index
    %8 = vector.load %arg7[%c0_6, %c0_7] : memref<16x96xf32, #tpu.memory_space<vmem>>, vector<16x96xf32>
    tpu.vector_store %arg7[%c0_6, %c0_7], %7 {strides = array<i32>} : memref<16x96xf32, #tpu.memory_space<vmem>>, vector<16x96xf32>,
    %c0_i32_8 = arith.constant 0 : i32
    %9 = arith.cmpi eq, %arg2, %c0_i32_8 : i32
    %10 = arith.extui %9 : i1 to i32
    %c0_i32_9 = arith.constant 0 : i32
    %11 = arith.cmpi ne, %10, %c0_i32_9 : i32
    scf.if %11 {
      %c0_10 = arith.constant 0 : index
      %c0_11 = arith.constant 0 : index
      %12 = vector.load %arg7[%c0_10, %c0_11] : memref<16x96xf32, #tpu.memory_space<vmem>>, vector<16x96xf32>
      %c0_12 = arith.constant 0 : index
      %c0_13 = arith.constant 0 : index
      %13 = vector.load %arg5[%c0_12, %c0_13] : memref<1x96xf32, #tpu.memory_space<vmem>>, vector<1x96xf32>
      %14 = vector.broadcast %13 : vector<1x96xf32> to vector<16x96xf32>
      %15 = arith.addf %12, %14 : vector<16x96xf32>
      %c0_14 = arith.constant 0 : index
      %c0_15 = arith.constant 0 : index
      %16 = vector.load %arg6[%c0_14, %c0_15] : memref<16x96xf32, #tpu.memory_space<vmem>>, vector<16x96xf32>
      tpu.vector_store %arg6[%c0_14, %c0_15], %15 {strides = array<i32>} : memref<16x96xf32, #tpu.memory_space<vmem>>, vector<16x96xf32>,
    } else {
    }
    return
  }
  func.func @transform_0(%arg0: i32, %arg1: i32, %arg2: i32) -> (i32, i32) {
    %c0_i32 = arith.constant 0 : i32
    return %arg0, %arg2 : i32, i32
  }
  func.func @transform_1(%arg0: i32, %arg1: i32, %arg2: i32) -> (i32, i32) {
    %c0_i32 = arith.constant 0 : i32
    return %arg2, %arg1 : i32, i32
  }
  func.func @transform_2(%arg0: i32, %arg1: i32, %arg2: i32) -> (i32, i32) {
    %c0_i32 = arith.constant 0 : i32
    %c0_i32_0 = arith.constant 0 : i32
    return %c0_i32, %arg1 : i32, i32
  }
  func.func @transform_3(%arg0: i32, %arg1: i32, %arg2: i32) -> (i32, i32) {
    %c0_i32 = arith.constant 0 : i32
    return %arg0, %arg1 : i32, i32
  }
}

</mosaic_0001>

<llo_original>
// kernel: tpu_custom_call.1
$region0: #{tpu_custom_call.1}
  #allocation0 [shape = 'u32[]', space=smem, size = 0x4, offset = 0x4, fixed_abs, tag = 'smem constant byte address 0x4 - core index']
  #allocation1 [shape = 'u32[144,128]{1,0:T(1,128)}', space=vmem, size = 0x12000, scoped, tag = 'internal scratch']
  #allocation2 [shape = 'f32[16,96]{1,0:T(8,128)}', space=vmem, size = 0x2000, scoped, tag = 'scratch operand']
  %s0 = inlined_call_operand.hbm [shape: f32[16,32], index: 0, kind: input, shape index: {}]
  %s1 = inlined_call_operand.hbm [shape: f32[32,96], index: 1, kind: input, shape index: {}]
  %s2 = inlined_call_operand.vmem [shape: f32[1,96], index: 2, kind: input, shape index: {}]
  %s3 = inlined_call_operand.hbm [shape: f32[16,96], index: 3, kind: output, shape index: {}]
  %s4 = sld [smem:[#allocation0]]
  $region38: #{tpu_custom_call.1} parent=0
    _
  %s6 = ssub.s32 1, %s4
  %s7 = scalar_select 0, %s6, %s4
  $region1: #{tpu_custom_call.1} parent=0
    #allocation3 [shape = 'u8[8192]{0}', space=vmem, size = 0x2000, scoped, tag = 'input window, operand 0, single buffered']
    #allocation4 [shape = 's32[1]{0}', space=sflag, size = 0x4, scoped, tag = 'scoped memory for tpu_custom_call.1']
    #allocation5 [shape = 's32[1]{0}', space=sflag, size = 0x4, scoped, tag = 'scoped memory for tpu_custom_call.1']
    #allocation6 [shape = 'u8[16384]{0}', space=vmem, size = 0x4000, scoped, tag = 'input window, operand 1, single buffered']
    #allocation7 [shape = 's32[1]{0}', space=sflag, size = 0x4, scoped, tag = 'scoped memory for tpu_custom_call.1']
    #allocation8 [shape = 'u8[8192]{0}', space=vmem, size = 0x2000, scoped, tag = 'output window, operand 0, single buffered']
    %8 = vsyncpa [#allocation4], 0
    %9 = vsyncpa [#allocation7], 0
    %10 = vsyncpa [#allocation5], 0
    // Predicated region
    $region2: #{tpu_custom_call.1} parent=1 // pred_check
      _
    $region3: #{tpu_custom_call.1} parent=1 // pred_check_branch
      %12 = sbr.rel (0) target = $region5
    $region4: #{tpu_custom_call.1} parent=1 // pred_region
      %s14 = ssub.s32 256, 256
      %15 = vsyncadd [#allocation4], %s14
      %s16 = sshll.u32 [#allocation3], 4
      %s17 = int_to_ptr.vmem [resolvable:$true] %s16
      %22 = dma.hbm_to_vmem [thread:$0]  %s0, 256, %s17, [#allocation4], 128, 128, 8
    $region5: #{tpu_custom_call.1} parent=1 // pred_fallthru
      _
    // Predicated region
    $region6: #{tpu_custom_call.1} parent=1 // pred_check
      _
    $region7: #{tpu_custom_call.1} parent=1 // pred_check_branch
      %24 = sbr.rel (0) target = $region9
    $region8: #{tpu_custom_call.1} parent=1 // pred_region
      %s26 = ssub.s32 512, 512
      %27 = vsyncadd [#allocation7], %s26
      %s28 = sshll.u32 [#allocation6], 4
      %s29 = int_to_ptr.vmem [resolvable:$true] %s28
      %34 = dma.hbm_to_vmem [thread:$0]  %s1, 512, %s29, [#allocation7], 128, 128, 8
    $region9: #{tpu_custom_call.1} parent=1 // pred_fallthru
      _
    // Predicated region
    $region10: #{tpu_custom_call.1} parent=1 // pred_check
      _
    $region11: #{tpu_custom_call.1} parent=1 // pred_check_branch
      %36 = sbr.rel (0) target = $region13
    $region12: #{tpu_custom_call.1} parent=1 // pred_region
      _
    $region13: #{tpu_custom_call.1} parent=1 // pred_fallthru
      _
    // Predicated region
    $region14: #{tpu_custom_call.1} parent=1 // pred_check
      _
    $region15: #{tpu_custom_call.1} parent=1 // pred_check_branch
      %38 = sbr.rel (0) target = $region17
    $region16: #{tpu_custom_call.1} parent=1 // pred_region
      %39 = dma.done [#allocation4], 256
    $region17: #{tpu_custom_call.1} parent=1 // pred_fallthru
      _
    // Predicated region
    $region18: #{tpu_custom_call.1} parent=1 // pred_check
      _
    $region19: #{tpu_custom_call.1} parent=1 // pred_check_branch
      %41 = sbr.rel (0) target = $region21
    $region20: #{tpu_custom_call.1} parent=1 // pred_region
      %42 = dma.done [#allocation7], 512
    $region21: #{tpu_custom_call.1} parent=1 // pred_fallthru
      _
    %p43 = scmp.eq.s32.totalorder 0, 0
    // Predicated region
    $region22: #{tpu_custom_call.1} parent=1 // pred_check
      %p44 = pneg %p43
    $region23: #{tpu_custom_call.1} parent=1 // pred_check_branch
      %46 = sbr.rel (%p44) target = $region25
    $region24: #{tpu_custom_call.1} parent=1 // pred_region
      %vm47 = vcmask 785408
      %48 = vst.msk [vmem:[#allocation2] sm:$0xff] %vm47, 0.0
      %49 = vst.msk [vmem:[#allocation2 + $0x8] sm:$0xff] %vm47, 0.0
    $region25: #{tpu_custom_call.1} parent=1 // pred_fallthru
      _
    %v50 = vld [vmem:[#allocation2] sm:$0xff]
    %v51 = vld [vmem:[#allocation2 + $0x8] sm:$0xff]
    %v52 = vld [vmem:[#allocation3] sm:$0xff]
    %v53 = vld [vmem:[#allocation3 + $0x8] sm:$0xff]
    %v54 = vld [vmem:[#allocation6] sm:$0xff]
    %v55 = vld [vmem:[#allocation6 + $0x8] sm:$0xff]
    %v56 = vld [vmem:[#allocation6 + $0x10] sm:$0xff]
    %v57 = vld [vmem:[#allocation6 + $0x18] sm:$0xff]
    %vm58 = vcmask 261120
    %v60 = vsel %vm58, %v52, 0
    %v63 = vsel %vm58, %v53, 0
    %65 = vmatprep.subr.mxu0 0.0
    %66 = vmatpush1.msra.mxu0 %v54
    %67 = vmatprep.subr.mxu0 0.0
    %68 = vmatpush1.msra.mxu0 %v55
    %69 = vmatprep.subr.mxu0 0.0
    %70 = vmatpush1.msra.mxu0 %v56
    %71 = vmatprep.subr.mxu0 0.0
    %72 = vmatpush1.msra.mxu0 %v57
    %73 = vmatprep.subr.mxu0 0.0
    %74 = vmatpush1.msra.mxu0 0.0
    %75 = vmatprep.subr.mxu0 0.0
    %76 = vmatpush1.msra.mxu0 0.0
    %77 = vmatprep.subr.mxu0 0.0
    %78 = vmatpush1.msra.mxu0 0.0
    %79 = vmatprep.subr.mxu0 0.0
    %80 = vmatpush1.msra.mxu0 0.0
    %81 = vmatprep.subr.mxu0 0.0
    %82 = vmatpush1.msra.mxu0 0.0
    %83 = vmatprep.subr.mxu0 0.0
    %84 = vmatpush1.msra.mxu0 0.0
    %85 = vmatprep.subr.mxu0 0.0
    %86 = vmatpush1.msra.mxu0 0.0
    %87 = vmatprep.subr.mxu0 0.0
    %88 = vmatpush1.msra.mxu0 0.0
    %89 = vmatprep.subr.mxu0 0.0
    %90 = vmatpush1.msra.mxu0 0.0
    %91 = vmatprep.subr.mxu0 0.0
    %92 = vmatpush1.msra.mxu0 0.0
    %93 = vmatprep.subr.mxu0 0.0
    %94 = vmatpush1.msra.mxu0 0.0
    %95 = vmatprep.subr.mxu0 0.0
    %96 = vmatpush1.msra.mxu0 0.0
    %97 = vmatprep.subr.mxu0 0.0
    %98 = vmatpush1.msra.mxu0 0.0
    %99 = vmatprep.subr.mxu0 0.0
    %100 = vmatpush1.msra.mxu0 0.0
    %101 = vmatprep.subr.mxu0 0.0
    %102 = vmatpush1.msra.mxu0 0.0
    %103 = vmatprep.subr.mxu0 0.0
    %104 = vmatpush1.msra.mxu0 0.0
    %105 = vmatprep.subr.mxu0 0.0
    %106 = vmatpush1.msra.mxu0 0.0
    %107 = vmatprep.subr.mxu0 0.0
    %108 = vmatpush1.msra.mxu0 0.0
    %109 = vmatprep.subr.mxu0 0.0
    %110 = vmatpush1.msra.mxu0 0.0
    %111 = vmatprep.subr.mxu0 0.0
    %112 = vmatpush1.msra.mxu0 0.0
    %113 = vmatprep.subr.mxu0 0.0
    %114 = vmatpush1.msra.mxu0 0.0
    %115 = vmatprep.subr.mxu0 0.0
    %116 = vmatpush1.msra.mxu0 0.0
    %117 = vmatprep.subr.mxu0 0.0
    %118 = vmatpush1.msra.mxu0 0.0
    %119 = vmatprep.subr.mxu0 0.0
    %120 = vmatpush1.msra.mxu0 0.0
    %121 = vmatprep.subr.mxu0 0.0
    %122 = vmatpush1.msra.mxu0 0.0
    %123 = vmatprep.subr.mxu0 0.0
    %124 = vmatpush1.msra.mxu0 0.0
    %125 = vmatprep.subr.mxu0 0.0
    %126 = vmatpush1.msra.mxu0 0.0
    %127 = vmatprep.subr.mxu0 0.0
    %128 = vmatpush1.msra.mxu0 0.0
    %129 = vmatprep.mubr.f32.mxu0 0.0
    %130 = vmatmul.mubr.f32.gmra.mrb[0].mxu0 %v60
    %v131 = vpop.f32.mrb[0].mxu0
    %v132 = vadd.f32 0.0, %v131
    %v133 = vpop.f32.mrb[0].mxu0
    %134 = vmatprep.mubr.f32.mxu0 0.0
    %135 = vmatmul.mubr.f32.gmra.mrb[0].mxu0 %v63
    %v136 = vpop.f32.mrb[0].mxu0
    %v137 = vadd.f32 0.0, %v136
    %v138 = vpop.f32.mrb[0].mxu0
    %139 = vdwg.mxu0
    %v140 = vadd.f32 %v50, %v132
    %v141 = vadd.f32 %v51, %v137
    %vm142 = vcmask 785408
    %143 = vst.msk [vmem:[#allocation2] sm:$0xff] %vm142, %v140
    %144 = vst.msk [vmem:[#allocation2 + $0x8] sm:$0xff] %vm142, %v141
    // Predicated region
    $region26: #{tpu_custom_call.1} parent=1 // pred_check
      %p145 = pneg %p43
    $region27: #{tpu_custom_call.1} parent=1 // pred_check_branch
      %147 = sbr.rel (%p145) target = $region29
    $region28: #{tpu_custom_call.1} parent=1 // pred_region
      %v148 = vld [vmem:[#allocation2] sm:$0xff]
      %v149 = vld [vmem:[#allocation2 + $0x8] sm:$0xff]
      %v150 = vld [vmem:[%s2] sm:$0x1]
      %v152 = vlaneseq
      %v153 = vshrl.u32 %v152, 7
      %v154 = vsub.s32 0, %v153
      %v155 = vrot.slane %v150, %v154
      %v157 = vadd.f32 %v148, %v155
      %v158 = vadd.f32 %v149, %v155
      %159 = vst.msk [vmem:[#allocation8] sm:$0xff] %vm142, %v157
      %160 = vst.msk [vmem:[#allocation8 + $0x8] sm:$0xff] %vm142, %v158
    $region29: #{tpu_custom_call.1} parent=1 // pred_fallthru
      _
    // Predicated region
    $region30: #{tpu_custom_call.1} parent=1 // pred_check
      _
    $region31: #{tpu_custom_call.1} parent=1 // pred_check_branch
      %162 = sbr.rel (0) target = $region33
    $region32: #{tpu_custom_call.1} parent=1 // pred_region
      %s164 = ssub.s32 256, 256
      %165 = vsyncadd [#allocation5], %s164
      %s166 = sshll.u32 [#allocation8], 4
      %s167 = int_to_ptr.vmem [resolvable:$true] %s166
      %172 = dma.vmem_to_hbm [thread:$0]  %s167, 256, %s3, [#allocation5], 128, 128, 8
    $region33: #{tpu_custom_call.1} parent=1 // pred_fallthru
      _
    // Predicated region
    $region34: #{tpu_custom_call.1} parent=1 // pred_check
      _
    $region35: #{tpu_custom_call.1} parent=1 // pred_check_branch
      %174 = sbr.rel (0) target = $region37
    $region36: #{tpu_custom_call.1} parent=1 // pred_region
      %175 = dma.done [#allocation5], 256
    $region37: #{tpu_custom_call.1} parent=1 // pred_fallthru
      _
    %176 = vsyncpa [#allocation4], 1
    %177 = vsyncpa [#allocation7], 1
    %178 = vsyncpa [#allocation5], 1

</llo_original>
